<compile_context>
chip_gen: v7x
topology: tpu7x:2x2x1
jax: 0.10.0
libtpu: 0.0.40
codegen_flags: <defaults>
</compile_context>

<pallas_src>
import math
import functools

import jax
import jax.numpy as jnp
from jax import lax
from jax.experimental import pallas as pl
from jax.experimental.pallas import tpu as pltpu


# -----------------------------------------------------------------------------
# Pallas kernel: one row-tile per grid step -> masked per-row loss sums.
# -----------------------------------------------------------------------------

def _wing_loss_kernel(t_ref, p_ref, *rest, wing_w, inv_eps, wing_c,
                      n_rows, tm, has_weights, needs_mask):
    if has_weights:
        w_ref, o_ref = rest
    else:
        (o_ref,) = rest

    # Native-dtype load, f32 compute (mandatory on v5e: no bf16 VPU/EUP path).
    t = t_ref[...].astype(jnp.float32)
    p = p_ref[...].astype(jnp.float32)

    # Elementwise wing transform (VPU + EUP log).
    abs_err = jnp.abs(t - p)
    loss = jnp.where(abs_err <= wing_w,
                     wing_w * jnp.log(1.0 + abs_err * inv_eps),
                     abs_err - wing_c)

    # Per-row sum over the feature (lane) axis.
    row_sum = jnp.sum(loss, axis=1, keepdims=True)                  # (tm, 1)
    if has_weights:
        row_sum = row_sum * w_ref[...]
    if needs_mask:
        # Mask out-of-range rows of the tail tile BEFORE any accumulation/use.
        # jnp.where selects, so NaN/Inf from garbage tail rows cannot leak.
        row_ids = pl.program_id(0) * tm + lax.broadcasted_iota(jnp.int32, (tm, 1), 0)
        row_sum = jnp.where(row_ids < n_rows, row_sum, 0.0)

    o_ref[...] = row_sum


# -----------------------------------------------------------------------------
# Wrapper
# -----------------------------------------------------------------------------

def wing_loss(targets, predictions, euler_angle_weights=None,
              wing_w=10.0, wing_epsilon=2.0, max_rows_per_block=None):
    """WingLoss forward. targets/predictions: (N, D); weights: optional (N,)."""
    assert targets.shape == predictions.shape
    assert targets.ndim == 2, "WingLoss kernel expects 2-D (batch, features) inputs"
    N, D = targets.shape
    wing_c = wing_w * (1.0 - math.log(1.0 + wing_w / wing_epsilon))

    elt = jnp.dtype(targets.dtype).itemsize
    d_pad = max(128, ((D + 127) // 128) * 128)     # lane-padded feature width

    # Row-tile sizing: 2 inputs x 2 pipeline buffers x tm x d_pad x elt <= ~8 MiB,
    # capped at 4096 rows, multiple of 8.  Fits comfortably under the 32 MiB
    # scoped-VMEM limit on v5e/v6e/v7x (leaving headroom for f32 intermediates).
    input_budget = 8 << 20
    tm_cap = input_budget // (4 * d_pad * elt)
    tm_cap = max(8, min(4096, (tm_cap // 8) * 8))
    if max_rows_per_block is not None:
        tm_cap = max(8, min(tm_cap, (max_rows_per_block // 8) * 8))
    tm = N if N <= tm_cap else tm_cap              # single full block when small

    grid_n = (N + tm - 1) // tm
    needs_mask = (N % tm) != 0
    has_weights = euler_angle_weights is not None

    args = [targets, predictions]
    in_specs = [pl.BlockSpec((tm, D), lambda i: (i, 0)),
                pl.BlockSpec((tm, D), lambda i: (i, 0))]
    if has_weights:
        args.append(euler_angle_weights.astype(jnp.float32).reshape(N, 1))
        in_specs.append(pl.BlockSpec((tm, 1), lambda i: (i, 0)))

    kernel = functools.partial(
        _wing_loss_kernel,
        wing_w=float(wing_w), inv_eps=float(1.0 / wing_epsilon),
        wing_c=float(wing_c), n_rows=N, tm=tm,
        has_weights=has_weights, needs_mask=needs_mask)

    bytes_accessed = 2 * N * D * elt + 4 * grid_n * tm + (4 * N if has_weights else 0)
    cost = pl.CostEstimate(flops=8 * N * D, transcendentals=N * D,
                           bytes_accessed=int(bytes_accessed))

    row_sums = pl.pallas_call(
        kernel,
        out_shape=jax.ShapeDtypeStruct((grid_n * tm, 1), jnp.float32),
        grid=(grid_n,),
        in_specs=in_specs,
        out_specs=pl.BlockSpec((tm, 1), lambda i: (i, 0)),
        compiler_params=pltpu.CompilerParams(
            dimension_semantics=("parallel",),      # no cross-step carry; 2-TC friendly
            vmem_limit_bytes=32 << 20),
        cost_estimate=cost,
    )(*args)

    # Tiny final reduction (<= padded-N f32 scalars) in plain XLA; tail rows are 0.
    return jnp.sum(row_sums) / N


# -----------------------------------------------------------------------------
# Pure-JAX reference (mirrors the PyTorch module)
# -----------------------------------------------------------------------------

def wing_loss_ref(targets, predictions, euler_angle_weights=None,
                  wing_w=10.0, wing_epsilon=2.0):
    wing_c = wing_w * (1.0 - math.log(1.0 + wing_w / wing_epsilon))
    abs_error = jnp.abs(targets - predictions)
    loss = jnp.where(abs_error <= wing_w,
                     wing_w * jnp.log(1.0 + abs_error / wing_epsilon),
                     abs_error - wing_c)
    loss_sum = jnp.sum(loss, axis=1)
    if euler_angle_weights is not None:
        loss_sum = loss_sum * euler_angle_weights
    return jnp.mean(loss_sum)


# -----------------------------------------------------------------------------
# Demo / smoke test
# -----------------------------------------------------------------------------

if __name__ == "__main__":
    key = jax.random.PRNGKey(0)
    k1, k2, k3, k4, k5 = jax.random.split(key, 5)

    # Typical landmark-regression shapes: batch=8, 98 landmarks * 2 coords = 196.
    N, D = 8, 196
    targets = jax.random.normal(k1, (N, D), jnp.float32) * 5.0
    # Large noise so both wing branches (|e| <= w and |e| > w) are exercised.
    predictions = targets + jax.random.normal(k2, (N, D), jnp.float32) * 8.0
    weights = jax.random.uniform(k3, (N,), jnp.float32) + 0.5

    # 1) no weights
    out1 = jax.block_until_ready(wing_loss(targets, predictions))
    ref1 = jax.block_until_ready(wing_loss_ref(targets, predictions))
    assert bool(jnp.isfinite(out1))
    assert abs(float(out1) - float(ref1)) <= 1e-4 * (1.0 + abs(float(ref1))), (out1, ref1)

    # 2) with euler_angle_weights
    out2 = jax.block_until_ready(wing_loss(targets, predictions, weights))
    ref2 = jax.block_until_ready(wing_loss_ref(targets, predictions, weights))
    assert bool(jnp.isfinite(out2))
    assert abs(float(out2) - float(ref2)) <= 1e-4 * (1.0 + abs(float(ref2))), (out2, ref2)

    # 3) multi-tile path with a masked tail tile (N not a multiple of the tile).
    N3, D3 = 20, 64
    t3 = jax.random.normal(k4, (N3, D3), jnp.float32) * 5.0
    p3 = t3 + jax.random.normal(k5, (N3, D3), jnp.float32) * 8.0
    out3 = jax.block_until_ready(wing_loss(t3, p3, max_rows_per_block=8))
    ref3 = jax.block_until_ready(wing_loss_ref(t3, p3))
    assert bool(jnp.isfinite(out3))
    assert abs(float(out3) - float(ref3)) <= 1e-4 * (1.0 + abs(float(ref3))), (out3, ref3)

    # 4) bf16 inputs: native-dtype load in the kernel, f32 compute.
    tb = targets.astype(jnp.bfloat16)
    pb = predictions.astype(jnp.bfloat16)
    out4 = jax.block_until_ready(wing_loss(tb, pb))
    ref4 = jax.block_until_ready(
        wing_loss_ref(tb.astype(jnp.float32), pb.astype(jnp.float32)))
    assert bool(jnp.isfinite(out4))
    assert abs(float(out4) - float(ref4)) <= 1e-3 * (1.0 + abs(float(ref4))), (out4, ref4)

    print("KERNEL_OK")
</pallas_src>

<mosaic_0001>
module attributes {stable_mosaic.version = 11 : i64} {
  func.func @_wing_loss_kernel(%arg0: i32, %arg1: memref<8x196xf32, #tpu.memory_space<vmem>>, %arg2: memref<8x196xf32, #tpu.memory_space<vmem>>, %arg3: memref<8x1xf32, #tpu.memory_space<vmem>>) attributes {dimension_semantics = [#tpu.dimension_semantics<parallel>], iteration_bounds = array<i64: 1>, scalar_prefetch = 0 : i64, scratch_operands = 0 : i64, tpu.core_type = #tpu.core_type<tc>, window_params = [{transform_indices = @transform_0, window_bounds = array<i64: 8, 196>}, {transform_indices = @transform_1, window_bounds = array<i64: 8, 196>}, {transform_indices = @transform_2, window_bounds = array<i64: 8, 1>}]} {
    %c0 = arith.constant 0 : index
    %c0_0 = arith.constant 0 : index
    %0 = vector.load %arg1[%c0, %c0_0] : memref<8x196xf32, #tpu.memory_space<vmem>>, vector<8x196xf32>
    %c0_1 = arith.constant 0 : index
    %c0_2 = arith.constant 0 : index
    %1 = vector.load %arg2[%c0_1, %c0_2] : memref<8x196xf32, #tpu.memory_space<vmem>>, vector<8x196xf32>
    %2 = arith.subf %0, %1 : vector<8x196xf32>
    %3 = math.absf %2 : vector<8x196xf32>
    %cst = arith.constant 1.000000e+01 : f32
    %4 = vector.broadcast %cst : f32 to vector<8x196xf32>
    %5 = arith.cmpf ole, %3, %4 : vector<8x196xf32>
    %cst_3 = arith.constant 5.000000e-01 : f32
    %6 = vector.broadcast %cst_3 : f32 to vector<8x196xf32>
    %7 = arith.mulf %3, %6 : vector<8x196xf32>
    %cst_4 = arith.constant 1.000000e+00 : f32
    %8 = vector.broadcast %cst_4 : f32 to vector<8x196xf32>
    %9 = arith.addf %8, %7 : vector<8x196xf32>
    %10 = math.log %9 : vector<8x196xf32>
    %cst_5 = arith.constant 1.000000e+01 : f32
    %11 = vector.broadcast %cst_5 : f32 to vector<8x196xf32>
    %12 = arith.mulf %11, %10 : vector<8x196xf32>
    %cst_6 = arith.constant -7.9175949 : f32
    %13 = vector.broadcast %cst_6 : f32 to vector<8x196xf32>
    %14 = arith.subf %3, %13 : vector<8x196xf32>
    %15 = arith.select %5, %12, %14 : vector<8x196xi1>, vector<8x196xf32>
    %cst_7 = arith.constant dense<0.000000e+00> : vector<8xf32>
    %16 = vector.multi_reduction <add>, %15, %cst_7 [1] : vector<8x196xf32> to vector<8xf32>
    %17 = vector.shape_cast %16 : vector<8xf32> to vector<8x1xf32>
    %c0_8 = arith.constant 0 : index
    %c0_9 = arith.constant 0 : index
    %18 = vector.load %arg3[%c0_8, %c0_9] : memref<8x1xf32, #tpu.memory_space<vmem>>, vector<8x1xf32>
    tpu.vector_store %arg3[%c0_8, %c0_9], %17 {strides = array<i32>} : memref<8x1xf32, #tpu.memory_space<vmem>>, vector<8x1xf32>,
    return
  }
  func.func @transform_0(%arg0: i32) -> (i32, i32) {
    %c0_i32 = arith.constant 0 : i32
    %c0_i32_0 = arith.constant 0 : i32
    return %arg0, %c0_i32 : i32, i32
  }
  func.func @transform_1(%arg0: i32) -> (i32, i32) {
    %c0_i32 = arith.constant 0 : i32
    %c0_i32_0 = arith.constant 0 : i32
    return %arg0, %c0_i32 : i32, i32
  }
  func.func @transform_2(%arg0: i32) -> (i32, i32) {
    %c0_i32 = arith.constant 0 : i32
    %c0_i32_0 = arith.constant 0 : i32
    return %arg0, %c0_i32 : i32, i32
  }
}

</mosaic_0001>

<llo_original>
// kernel: tpu_custom_call.1
$region0: #{tpu_custom_call.1}
  #allocation0 [shape = 'u32[]', space=smem, size = 0x4, offset = 0x4, fixed_abs, tag = 'smem constant byte address 0x4 - core index']
  #allocation1 [shape = 'u32[144,128]{1,0:T(1,128)}', space=vmem, size = 0x12000, scoped, tag = 'internal scratch']
  %s0 = inlined_call_operand.hbm [shape: f32[8,196], index: 0, kind: input, shape index: {}]
  %s1 = inlined_call_operand.hbm [shape: f32[8,196], index: 1, kind: input, shape index: {}]
  %s2 = inlined_call_operand.vmem [shape: f32[8,1], index: 2, kind: output, shape index: {}]
  %s3 = sld [smem:[#allocation0]]
  $region26: #{tpu_custom_call.1} parent=0
    _
  %s5 = ssub.s32 1, %s3
  %s6 = scalar_select 0, %s5, %s3
  $region1: #{tpu_custom_call.1} parent=0
    #allocation2 [shape = 'u8[8192]{0}', space=vmem, size = 0x2000, scoped, tag = 'input window, operand 0, single buffered']
    #allocation3 [shape = 's32[1]{0}', space=sflag, size = 0x4, scoped, tag = 'scoped memory for tpu_custom_call.1']
    #allocation4 [shape = 'u8[8192]{0}', space=vmem, size = 0x2000, scoped, tag = 'input window, operand 1, single buffered']
    #allocation5 [shape = 's32[1]{0}', space=sflag, size = 0x4, scoped, tag = 'scoped memory for tpu_custom_call.1']
    %7 = vsyncpa [#allocation3], 0
    %8 = vsyncpa [#allocation5], 0
    // Predicated region
    $region2: #{tpu_custom_call.1} parent=1 // pred_check
      _
    $region3: #{tpu_custom_call.1} parent=1 // pred_check_branch
      %10 = sbr.rel (0) target = $region5
    $region4: #{tpu_custom_call.1} parent=1 // pred_region
      %s12 = ssub.s32 256, 256
      %13 = vsyncadd [#allocation3], %s12
      %s15 = sshll.u32 [#allocation2], 4
      %s16 = int_to_ptr.vmem [resolvable:$true] %s15
      %18 = dma.hbm_to_vmem [thread:$0]  %s0, 256, %s16, [#allocation3]
    $region5: #{tpu_custom_call.1} parent=1 // pred_fallthru
      _
    // Predicated region
    $region6: #{tpu_custom_call.1} parent=1 // pred_check
      _
    $region7: #{tpu_custom_call.1} parent=1 // pred_check_branch
      %20 = sbr.rel (0) target = $region9
    $region8: #{tpu_custom_call.1} parent=1 // pred_region
      %s22 = ssub.s32 256, 256
      %23 = vsyncadd [#allocation5], %s22
      %s25 = sshll.u32 [#allocation4], 4
      %s26 = int_to_ptr.vmem [resolvable:$true] %s25
      %28 = dma.hbm_to_vmem [thread:$0]  %s1, 256, %s26, [#allocation5]
    $region9: #{tpu_custom_call.1} parent=1 // pred_fallthru
      _
    // Predicated region
    $region10: #{tpu_custom_call.1} parent=1 // pred_check
      _
    $region11: #{tpu_custom_call.1} parent=1 // pred_check_branch
      %30 = sbr.rel (0) target = $region13
    $region12: #{tpu_custom_call.1} parent=1 // pred_region
      %31 = dma.done [#allocation3], 256
    $region13: #{tpu_custom_call.1} parent=1 // pred_fallthru
      _
    // Predicated region
    $region14: #{tpu_custom_call.1} parent=1 // pred_check
      _
    $region15: #{tpu_custom_call.1} parent=1 // pred_check_branch
      %33 = sbr.rel (0) target = $region17
    $region16: #{tpu_custom_call.1} parent=1 // pred_region
      %34 = dma.done [#allocation5], 256
    $region17: #{tpu_custom_call.1} parent=1 // pred_fallthru
      _
    %v35 = vld [vmem:[#allocation2] sm:$0xff]
    %v36 = vld [vmem:[#allocation2 + $0x8] sm:$0xff]
    %v37 = vld [vmem:[#allocation4] sm:$0xff]
    %v38 = vld [vmem:[#allocation4 + $0x8] sm:$0xff]
    %v39 = vsub.f32 %v35, %v37
    %v40 = vsub.f32 %v36, %v38
    %v41 = vand.u32 2147483647, %v39
    %v42 = vand.u32 2147483647, %v40
    %vm43 = vcmp.le.f32.partialorder %v41, 10.0
    %vm44 = vcmp.le.f32.partialorder %v42, 10.0
    %v45 = vmul.f32 %v41, 0.5
    %v46 = vmul.f32 %v42, 0.5
    %v47 = vadd.f32 %v45, 1.0
    %v48 = vadd.f32 %v46, 1.0
    %v49 = vlog2.pop %v47
    %v50 = vmul.f32 %v49, 0.6931472
    %v51 = vlog2.pop %v48
    %v52 = vmul.f32 %v51, 0.6931472
    %v53 = vmul.f32 %v50, 10.0
    %v54 = vmul.f32 %v52, 10.0
    %v55 = vsub.f32 %v41, -7.917595
    %v56 = vsub.f32 %v42, -7.917595
    %v57 = vsel %vm43, %v53, %v55
    %v58 = vsel %vm44, %v54, %v56
    %vm59 = vcmask 556032
    %v60 = vsel %vm59, %v58, 0.0
    %v61 = vadd.f32 %v57, %v60
    %62 = vadd.xlane.f32.xlu0 %v61
    %v63 = vpop.xlane.xlu0 %62
    %vm64 = vcmask 7168
    %65 = vst.msk [vmem:[%s2] sm:$0xff] %vm64, %v63
    // Predicated region
    $region18: #{tpu_custom_call.1} parent=1 // pred_check
      _
    $region19: #{tpu_custom_call.1} parent=1 // pred_check_branch
      %67 = sbr.rel (0) target = $region21
    $region20: #{tpu_custom_call.1} parent=1 // pred_region
      _
    $region21: #{tpu_custom_call.1} parent=1 // pred_fallthru
      _
    // Predicated region
    $region22: #{tpu_custom_call.1} parent=1 // pred_check
      _
    $region23: #{tpu_custom_call.1} parent=1 // pred_check_branch
      %69 = sbr.rel (0) target = $region25
    $region24: #{tpu_custom_call.1} parent=1 // pred_region
      _
    $region25: #{tpu_custom_call.1} parent=1 // pred_fallthru
      _
    %70 = vsyncpa [#allocation3], 1
    %71 = vsyncpa [#allocation5], 1

</llo_original>
